<compile_context>
chip_gen: v5e
topology: v5e:2x2
jax: 0.10.0
libtpu: 0.0.40
codegen_flags: <defaults>
</compile_context>

<pallas_src>
import functools

import jax
import jax.numpy as jnp
from jax.experimental import pallas as pl
from jax.experimental.pallas import tpu as pltpu


def _fused_kernel(x_ref, wct_ref, bc_ref, wp_ref, bp_ref, o_ref):
    # x_ref:  (4, TL)  channels on sublanes, time on lanes (lane-dense)
    # wct:    (H, 4)   folded (conv1d_first @ conv1d @ encoder) weight, transposed
    # bc:     (H, 1)   folded bias
    # wp:     (H, 1)   replaced proj head weight
    # bp:     (1, 1)   proj head bias
    # o_ref:  (1, TL)  per-frame scalar output, lane-dense
    x = x_ref[...]
    wct = wct_ref[...]

    # 4-wide contraction as VPU broadcast multiply-adds (MXU is wasted on K=4):
    #   e[h, t] = sum_c WcT[h, c] * x[c, t] + bc[h]
    e = bc_ref[...]                                  # (H, 1) -> broadcasts over lanes
    e = e + wct[:, 0:1] * x[0:1, :]
    e = e + wct[:, 1:2] * x[1:2, :]
    e = e + wct[:, 2:3] * x[2:3, :]
    e = e + wct[:, 3:4] * x[3:4, :]

    e = jax.nn.gelu(e)                               # EUP tanh path

    # proj head: out[t] = sum_h wp[h] * e[h, t] + bp  (sublane reduce, XLU)
    out = jnp.sum(wp_ref[...] * e, axis=0, keepdims=True) + bp_ref[...]
    o_ref[...] = out.astype(o_ref.dtype)


def finetuned_wav2vec2_forward(x_ncl, params, *, tile_cols=1024):
    """x_ncl: (B, 4, L) float32, NCL layout like PyTorch Conv1d input."""
    B, C_in, L = x_ncl.shape
    assert C_in == 4
    w1, b1, w2, b2, we, be, wp, bp = params
    H = we.shape[1]

    # Fold the three pre-GELU linear stages into a single (4 -> H) affine map.
    wc_t = (w1 @ w2 @ we).T                          # (H, 4)
    bc = ((b1 @ w2 + b2) @ we + be).T                # (H, 1)
    # wp is already (H, 1); bp is (1, 1)

    # Lane-dense tiling of the time axis: tile must be a multiple of 128.
    lane = 128
    tl = max(lane, min(int(tile_cols), pl.cdiv(L, lane) * lane))
    tl = (tl // lane) * lane
    Lp = pl.cdiv(L, tl) * tl
    if Lp != L:
        x_ncl = jnp.pad(x_ncl, ((0, 0), (0, 0), (0, Lp - L)))

    grid = (B, Lp // tl)
    const = lambda b, l: (0, 0)  # small params stay VMEM-resident each step

    out = pl.pallas_call(
        _fused_kernel,
        out_shape=jax.ShapeDtypeStruct((B, 1, Lp), jnp.float32),
        grid=grid,
        in_specs=[
            pl.BlockSpec((None, C_in, tl), lambda b, l: (b, 0, l)),  # x tile (4, tl)
            pl.BlockSpec((H, C_in), const),                          # WcT (H, 4)
            pl.BlockSpec((H, 1), const),                             # bc  (H, 1)
            pl.BlockSpec((H, 1), const),                             # wp  (H, 1)
            pl.BlockSpec((1, 1), const),                             # bp  (1, 1)
        ],
        out_specs=pl.BlockSpec((None, 1, tl), lambda b, l: (b, 0, l)),
        compiler_params=pltpu.CompilerParams(
            dimension_semantics=("parallel", "parallel")),
    )(x_ncl, wc_t, bc, wp, bp)

    # outputs['out'] : (B, L, 1) per-frame scalar prediction
    return out[:, 0, :L][..., None]


def init_params(key, hidden=32):
    """Deterministic synthetic parameters (PyTorch-style uniform fan-in init).

    Conv1d weights in PyTorch are (out_ch, in_ch, 1); stored here pre-transposed
    as (in_ch, out_ch) so the math is x @ W.
    """
    ks = jax.random.split(key, 8)

    def u(k, shape, fan_in):
        bound = 1.0 / jnp.sqrt(float(fan_in))
        return jax.random.uniform(k, shape, jnp.float32, -bound, bound)

    w1 = u(ks[0], (4, 4), 4)            # conv1d_first: 4 -> 4, k=1
    b1 = u(ks[1], (1, 4), 4)
    w2 = u(ks[2], (4, 12), 4)           # conv1d: 4 -> 12, k=1
    b2 = u(ks[3], (1, 12), 4)
    we = u(ks[4], (12, hidden), 12)     # synthetic pretrained encoder
    be = u(ks[5], (1, hidden), 12)
    wp = u(ks[6], (hidden, 1), hidden)  # replaced proj head: Linear(H, 1)
    bp = u(ks[7], (1, 1), hidden)
    return (w1, b1, w2, b2, we, be, wp, bp)


def reference_forward(x_ncl, params):
    """Pure-JAX reference following the unfused module structure."""
    w1, b1, w2, b2, we, be, wp, bp = params
    B, C, L = x_ncl.shape
    x = jnp.transpose(x_ncl, (0, 2, 1)).reshape(B * L, C)
    h1 = x @ w1 + b1
    h2 = h1 @ w2 + b2
    e = jax.nn.gelu(h2 @ we + be)
    out = e @ wp + bp
    return out.reshape(B, L, 1)


if __name__ == "__main__":
    key = jax.random.PRNGKey(0)
    k_x, k_p = jax.random.split(key)

    B, C, L, H = 2, 4, 16, 32
    x = jax.random.normal(k_x, (B, C, L), jnp.float32)   # NCL, like PyTorch
    params = init_params(k_p, hidden=H)

    fwd = jax.jit(functools.partial(finetuned_wav2vec2_forward, tile_cols=1024))
    out = fwd(x, params)
    out = jax.block_until_ready(out)

    ref = reference_forward(x, params)
    assert out.shape == (B, L, 1), out.shape
    assert jnp.allclose(out, ref, atol=1e-5, rtol=1e-5), "mismatch vs reference"
    print("KERNEL_OK")
</pallas_src>

<mosaic_0001>
module attributes {stable_mosaic.version = 11 : i64} {
  func.func @_fused_kernel(%arg0: i32, %arg1: i32, %arg2: memref<1x4x128xf32, #tpu.memory_space<vmem>>, %arg3: memref<32x4xf32, #tpu.memory_space<vmem>>, %arg4: memref<32x1xf32, #tpu.memory_space<vmem>>, %arg5: memref<32x1xf32, #tpu.memory_space<vmem>>, %arg6: memref<1x1xf32, #tpu.memory_space<vmem>>, %arg7: memref<1x1x128xf32, #tpu.memory_space<vmem>>) attributes {dimension_semantics = [#tpu.dimension_semantics<parallel>, #tpu.dimension_semantics<parallel>], iteration_bounds = array<i64: 2, 1>, scalar_prefetch = 0 : i64, scratch_operands = 0 : i64, tpu.core_type = #tpu.core_type<tc>, window_params = [{transform_indices = @transform_0, window_bounds = array<i64: 1, 4, 128>}, {pipeline_mode = #tpu.pipeline_mode<synchronous>, transform_indices = @transform_1, window_bounds = array<i64: 32, 4>}, {pipeline_mode = #tpu.pipeline_mode<synchronous>, transform_indices = @transform_2, window_bounds = array<i64: 32, 1>}, {pipeline_mode = #tpu.pipeline_mode<synchronous>, transform_indices = @transform_3, window_bounds = array<i64: 32, 1>}, {pipeline_mode = #tpu.pipeline_mode<synchronous>, transform_indices = @transform_4, window_bounds = array<i64: 1, 1>}, {transform_indices = @transform_5, window_bounds = array<i64: 1, 1, 128>}]} {
    %c0 = arith.constant 0 : index
    %c0_0 = arith.constant 0 : index
    %c0_1 = arith.constant 0 : index
    %0 = vector.load %arg2[%c0, %c0_0, %c0_1] : memref<1x4x128xf32, #tpu.memory_space<vmem>>, vector<1x4x128xf32>
    %1 = vector.shape_cast %0 : vector<1x4x128xf32> to vector<4x128xf32>
    %c0_2 = arith.constant 0 : index
    %c0_3 = arith.constant 0 : index
    %2 = vector.load %arg3[%c0_2, %c0_3] : memref<32x4xf32, #tpu.memory_space<vmem>>, vector<32x4xf32>
    %c0_4 = arith.constant 0 : index
    %c0_5 = arith.constant 0 : index
    %3 = vector.load %arg4[%c0_4, %c0_5] : memref<32x1xf32, #tpu.memory_space<vmem>>, vector<32x1xf32>
    %4 = vector.extract_strided_slice %2 {offsets = [0, 0], sizes = [32, 1], strides = [1, 1]} : vector<32x4xf32> to vector<32x1xf32>
    %5 = vector.extract_strided_slice %1 {offsets = [0, 0], sizes = [1, 128], strides = [1, 1]} : vector<4x128xf32> to vector<1x128xf32>
    %6 = vector.broadcast %4 : vector<32x1xf32> to vector<32x128xf32>
    %7 = vector.broadcast %5 : vector<1x128xf32> to vector<32x128xf32>
    %8 = arith.mulf %6, %7 : vector<32x128xf32>
    %9 = vector.broadcast %3 : vector<32x1xf32> to vector<32x128xf32>
    %10 = arith.addf %9, %8 : vector<32x128xf32>
    %11 = vector.extract_strided_slice %2 {offsets = [0, 1], sizes = [32, 1], strides = [1, 1]} : vector<32x4xf32> to vector<32x1xf32>
    %12 = vector.extract_strided_slice %1 {offsets = [1, 0], sizes = [1, 128], strides = [1, 1]} : vector<4x128xf32> to vector<1x128xf32>
    %13 = vector.broadcast %11 : vector<32x1xf32> to vector<32x128xf32>
    %14 = vector.broadcast %12 : vector<1x128xf32> to vector<32x128xf32>
    %15 = arith.mulf %13, %14 : vector<32x128xf32>
    %16 = arith.addf %10, %15 : vector<32x128xf32>
    %17 = vector.extract_strided_slice %2 {offsets = [0, 2], sizes = [32, 1], strides = [1, 1]} : vector<32x4xf32> to vector<32x1xf32>
    %18 = vector.extract_strided_slice %1 {offsets = [2, 0], sizes = [1, 128], strides = [1, 1]} : vector<4x128xf32> to vector<1x128xf32>
    %19 = vector.broadcast %17 : vector<32x1xf32> to vector<32x128xf32>
    %20 = vector.broadcast %18 : vector<1x128xf32> to vector<32x128xf32>
    %21 = arith.mulf %19, %20 : vector<32x128xf32>
    %22 = arith.addf %16, %21 : vector<32x128xf32>
    %23 = vector.extract_strided_slice %2 {offsets = [0, 3], sizes = [32, 1], strides = [1, 1]} : vector<32x4xf32> to vector<32x1xf32>
    %24 = vector.extract_strided_slice %1 {offsets = [3, 0], sizes = [1, 128], strides = [1, 1]} : vector<4x128xf32> to vector<1x128xf32>
    %25 = vector.broadcast %23 : vector<32x1xf32> to vector<32x128xf32>
    %26 = vector.broadcast %24 : vector<1x128xf32> to vector<32x128xf32>
    %27 = arith.mulf %25, %26 : vector<32x128xf32>
    %28 = arith.addf %22, %27 : vector<32x128xf32>
    %29 = arith.mulf %28, %28 : vector<32x128xf32>
    %30 = arith.mulf %28, %29 : vector<32x128xf32>
    %cst = arith.constant 4.471500e-02 : f32
    %31 = vector.broadcast %cst : f32 to vector<32x128xf32>
    %32 = arith.mulf %31, %30 : vector<32x128xf32>
    %33 = arith.addf %28, %32 : vector<32x128xf32>
    %cst_6 = arith.constant 0.797884583 : f32
    %34 = vector.broadcast %cst_6 : f32 to vector<32x128xf32>
    %35 = arith.mulf %34, %33 : vector<32x128xf32>
    %36 = math.tanh %35 : vector<32x128xf32>
    %cst_7 = arith.constant 1.000000e+00 : f32
    %37 = vector.broadcast %cst_7 : f32 to vector<32x128xf32>
    %38 = arith.addf %37, %36 : vector<32x128xf32>
    %cst_8 = arith.constant 5.000000e-01 : f32
    %39 = vector.broadcast %cst_8 : f32 to vector<32x128xf32>
    %40 = arith.mulf %39, %38 : vector<32x128xf32>
    %41 = arith.mulf %28, %40 : vector<32x128xf32>
    %c0_9 = arith.constant 0 : index
    %c0_10 = arith.constant 0 : index
    %42 = vector.load %arg5[%c0_9, %c0_10] : memref<32x1xf32, #tpu.memory_space<vmem>>, vector<32x1xf32>
    %43 = vector.broadcast %42 : vector<32x1xf32> to vector<32x128xf32>
    %44 = arith.mulf %43, %41 : vector<32x128xf32>
    %cst_11 = arith.constant dense<0.000000e+00> : vector<128xf32>
    %45 = vector.multi_reduction <add>, %44, %cst_11 [0] : vector<32x128xf32> to vector<128xf32>
    %46 = vector.shape_cast %45 : vector<128xf32> to vector<1x128xf32>
    %c0_12 = arith.constant 0 : index
    %c0_13 = arith.constant 0 : index
    %47 = vector.load %arg6[%c0_12, %c0_13] : memref<1x1xf32, #tpu.memory_space<vmem>>, vector<1x1xf32>
    %48 = vector.broadcast %47 : vector<1x1xf32> to vector<1x128xf32>
    %49 = arith.addf %46, %48 : vector<1x128xf32>
    %c0_14 = arith.constant 0 : index
    %c0_15 = arith.constant 0 : index
    %c0_16 = arith.constant 0 : index
    %50 = vector.load %arg7[%c0_14, %c0_15, %c0_16] : memref<1x1x128xf32, #tpu.memory_space<vmem>>, vector<1x1x128xf32>
    %51 = vector.shape_cast %50 : vector<1x1x128xf32> to vector<1x128xf32>
    %52 = vector.shape_cast %49 : vector<1x128xf32> to vector<1x1x128xf32>
    tpu.vector_store %arg7[%c0_14, %c0_15, %c0_16], %52 {strides = array<i32>} : memref<1x1x128xf32, #tpu.memory_space<vmem>>, vector<1x1x128xf32>,
    return
  }
  func.func @transform_0(%arg0: i32, %arg1: i32) -> (i32, i32, i32) {
    %c0_i32 = arith.constant 0 : i32
    %c0_i32_0 = arith.constant 0 : i32
    return %arg0, %c0_i32, %arg1 : i32, i32, i32
  }
  func.func @transform_1(%arg0: i32, %arg1: i32) -> (i32, i32) {
    %c0_i32 = arith.constant 0 : i32
    %c0_i32_0 = arith.constant 0 : i32
    %c0_i32_1 = arith.constant 0 : i32
    return %c0_i32, %c0_i32_0 : i32, i32
  }
  func.func @transform_2(%arg0: i32, %arg1: i32) -> (i32, i32) {
    %c0_i32 = arith.constant 0 : i32
    %c0_i32_0 = arith.constant 0 : i32
    %c0_i32_1 = arith.constant 0 : i32
    return %c0_i32, %c0_i32_0 : i32, i32
  }
  func.func @transform_3(%arg0: i32, %arg1: i32) -> (i32, i32) {
    %c0_i32 = arith.constant 0 : i32
    %c0_i32_0 = arith.constant 0 : i32
    %c0_i32_1 = arith.constant 0 : i32
    return %c0_i32, %c0_i32_0 : i32, i32
  }
  func.func @transform_4(%arg0: i32, %arg1: i32) -> (i32, i32) {
    %c0_i32 = arith.constant 0 : i32
    %c0_i32_0 = arith.constant 0 : i32
    %c0_i32_1 = arith.constant 0 : i32
    return %c0_i32, %c0_i32_0 : i32, i32
  }
  func.func @transform_5(%arg0: i32, %arg1: i32) -> (i32, i32, i32) {
    %c0_i32 = arith.constant 0 : i32
    %c0_i32_0 = arith.constant 0 : i32
    return %arg0, %c0_i32, %arg1 : i32, i32, i32
  }
}

</mosaic_0001>

<llo_original>
// kernel: finetuned_wav2vec2_forward.1
$region0: #{finetuned_wav2vec2_forward.1}
  #allocation0 [shape = 'u32[]', space=smem, size = 0x4, offset = 0x4, fixed_abs, tag = 'smem constant byte address 0x4 - core index']
  #allocation1 [shape = 'u32[72,128]{1,0:T(1,128)}', space=vmem, size = 0x9000, scoped, tag = 'internal scratch']
  #allocation2 [shape = 'f32[1,1]{1,0:T(1,128)S(1)}', space=vmem, size = 0x200, scoped, tag = 'scoped memory for finetuned_wav2vec2_forward.1']
  %s0 = inlined_call_operand.vmem [shape: f32[2,4,128], index: 0, kind: input, shape index: {}]
  %s1 = inlined_call_operand.vmem [shape: f32[32,4], index: 1, kind: input, shape index: {}]
  %s2 = inlined_call_operand.vmem [shape: f32[32,1], index: 2, kind: input, shape index: {}]
  %s3 = inlined_call_operand.vmem [shape: f32[32,1], index: 3, kind: input, shape index: {}]
  %s4 = inlined_call_operand.<no memory space> [shape: f32[1,1], index: 4, kind: input, shape index: {}]
  %s5 = inlined_call_operand.vmem [shape: f32[2,1,128], index: 5, kind: output, shape index: {}]
  %s6 = sld [smem:[#allocation0]]
  $region53: #{finetuned_wav2vec2_forward.1} parent=0
    _
  %s8 = ssub.s32 1, %s6
  %s9 = scalar_select 0, %s8, %s6
  %v10 = vstv %s4
  %11 = vst [vmem:[#allocation2] sm:$0x1] %v10
  loop: start=0, step=1, limit=4
  $region2: #{finetuned_wav2vec2_forward.1} parent=0 // loop_pre_header
    _
  $region3: #{finetuned_wav2vec2_forward.1} parent=0 // loop_header
    %s13 = sphi 0, %s17
    %p14 = scmp.ge.s32.totalorder %s13, 4
    %s20 = sphi 0, %s32
    %s21 = sphi 0, %s28
    %s22 = sphi 0, %s20
    %s23 = sphi 0, %s21
    %s24 = sphi 0, %s22
    %s25 = sphi 0, %s23
    %s37 = sphi 0, %s39
    %s40 = sphi 0, %s37
    %s41 = sphi 0, %s40
    %s57 = sphi 0, %s41
    %s61 = sphi 0, %s61
    %s63 = sphi 0, %s61
    %s64 = sphi 0, %s63
    %s78 = sphi 0, %s64
    %s82 = sphi 0, %s82
    %s84 = sphi 0, %s82
    %s85 = sphi 0, %s84
    %s99 = sphi 0, %s85
    %s103 = sphi 0, %s103
    %s105 = sphi 0, %s103
    %s106 = sphi 0, %s105
    %s120 = sphi 0, %s106
    %s124 = sphi 0, %s124
    %s126 = sphi 0, %s124
    %s127 = sphi 0, %s126
    %s141 = sphi 0, %s127
    %s149 = sphi 0, %s151
    %s152 = sphi 0, %s149
    %s153 = sphi 0, %s152
    %s169 = sphi 0, %s153
  $region4: #{finetuned_wav2vec2_forward.1} parent=0 // loop_header_branch
    %16 = sbr.rel (%p14) target = $region8
  $region5: #{finetuned_wav2vec2_forward.1} parent=0 // loop_body
    %s18 = ssub.s32 %s13, 1
    %s19 = ssub.s32 %s13, 2
    %s26 = sadd.s32 1, %s21
    %p27 = scmp.ge.s32.totalorder %s26, 1
    %s28 = scalar_select %p27, 0, %s26
    %s29 = sadd.s32 1, %s20
    %s30 = scalar_select %p27, %s29, %s20
    %p31 = scmp.ge.s32.totalorder %s30, 2
    %s32 = scalar_select %p31, 0, %s30
    %s33 = ssub.s32 %s20, %s32
    %s34 = ssub.s32 %s21, %s28
    %s35 = sor.u32 %s33, %s34
    %p36 = scmp.eq.s32.totalorder %s35, 0
    %s38 = sadd.s32 %s37, 1
    %s39 = scalar_select %p36, %s37, %s38
    %p42 = pneg %p36
    %p43 = scmp.eq.s32.totalorder %s13, 1
    %p44 = por %p42, %p43
    %p45 = scmp.ne.s32.totalorder %s37, %s40
    %p46 = scmp.eq.s32.totalorder %s13, 0
    %p47 = por %p45, %p46
    %p48 = scmp.ne.s32.totalorder %s37, %s40
    %p49 = scmp.eq.s32.totalorder %s18, 1
    %p50 = por %p48, %p49
    %p51 = scmp.ne.s32.totalorder %s40, %s41
    %p52 = scmp.eq.s32.totalorder %s18, 0
    %p53 = por %p51, %p52
    %p54 = scmp.ne.s32.totalorder %s40, %s41
    %p55 = scmp.eq.s32.totalorder %s19, 1
    %p56 = por %p54, %p55
    %p58 = scmp.ne.s32.totalorder %s41, %s57
    %p59 = scmp.eq.s32.totalorder %s19, 0
    %p60 = por %p58, %p59
    %s62 = sadd.s32 %s61, 1
    %p65 = scmp.eq.s32.totalorder %s13, 1
    %p66 = scmp.ne.s32.totalorder %s61, %s63
    %p67 = scmp.eq.s32.totalorder %s13, 0
    %p68 = por %p66, %p67
    %p69 = scmp.ne.s32.totalorder %s61, %s63
    %p70 = scmp.eq.s32.totalorder %s18, 1
    %p71 = por %p69, %p70
    %p72 = scmp.ne.s32.totalorder %s63, %s64
    %p73 = scmp.eq.s32.totalorder %s18, 0
    %p74 = por %p72, %p73
    %p75 = scmp.ne.s32.totalorder %s63, %s64
    %p76 = scmp.eq.s32.totalorder %s19, 1
    %p77 = por %p75, %p76
    %p79 = scmp.ne.s32.totalorder %s64, %s78
    %p80 = scmp.eq.s32.totalorder %s19, 0
    %p81 = por %p79, %p80
    %s83 = sadd.s32 %s82, 1
    %p86 = scmp.eq.s32.totalorder %s13, 1
    %p87 = scmp.ne.s32.totalorder %s82, %s84
    %p88 = scmp.eq.s32.totalorder %s13, 0
    %p89 = por %p87, %p88
    %p90 = scmp.ne.s32.totalorder %s82, %s84
    %p91 = scmp.eq.s32.totalorder %s18, 1
    %p92 = por %p90, %p91
    %p93 = scmp.ne.s32.totalorder %s84, %s85
    %p94 = scmp.eq.s32.totalorder %s18, 0
    %p95 = por %p93, %p94
    %p96 = scmp.ne.s32.totalorder %s84, %s85
    %p97 = scmp.eq.s32.totalorder %s19, 1
    %p98 = por %p96, %p97
    %p100 = scmp.ne.s32.totalorder %s85, %s99
    %p101 = scmp.eq.s32.totalorder %s19, 0
    %p102 = por %p100, %p101
    %s104 = sadd.s32 %s103, 1
    %p107 = scmp.eq.s32.totalorder %s13, 1
    %p108 = scmp.ne.s32.totalorder %s103, %s105
    %p109 = scmp.eq.s32.totalorder %s13, 0
    %p110 = por %p108, %p109
    %p111 = scmp.ne.s32.totalorder %s103, %s105
    %p112 = scmp.eq.s32.totalorder %s18, 1
    %p113 = por %p111, %p112
    %p114 = scmp.ne.s32.totalorder %s105, %s106
    %p115 = scmp.eq.s32.totalorder %s18, 0
    %p116 = por %p114, %p115
    %p117 = scmp.ne.s32.totalorder %s105, %s106
    %p118 = scmp.eq.s32.totalorder %s19, 1
    %p119 = por %p117, %p118
    %p121 = scmp.ne.s32.totalorder %s106, %s120
    %p122 = scmp.eq.s32.totalorder %s19, 0
    %p123 = por %p121, %p122
    %s125 = sadd.s32 %s124, 1
    %p128 = scmp.eq.s32.totalorder %s13, 1
    %p129 = scmp.ne.s32.totalorder %s124, %s126
    %p130 = scmp.eq.s32.totalorder %s13, 0
    %p131 = por %p129, %p130
    %p132 = scmp.ne.s32.totalorder %s124, %s126
    %p133 = scmp.eq.s32.totalorder %s18, 1
    %p134 = por %p132, %p133
    %p135 = scmp.ne.s32.totalorder %s126, %s127
    %p136 = scmp.eq.s32.totalorder %s18, 0
    %p137 = por %p135, %p136
    %p138 = scmp.ne.s32.totalorder %s126, %s127
    %p139 = scmp.eq.s32.totalorder %s19, 1
    %p140 = por %p138, %p139
    %p142 = scmp.ne.s32.totalorder %s127, %s141
    %p143 = scmp.eq.s32.totalorder %s19, 0
    %p144 = por %p142, %p143
    %s145 = ssub.s32 %s20, %s32
    %s146 = ssub.s32 %s21, %s28
    %s147 = sor.u32 %s145, %s146
    %p148 = scmp.eq.s32.totalorder %s147, 0
    %s150 = sadd.s32 %s149, 1
    %s151 = scalar_select %p148, %s149, %s150
    %p154 = pneg %p148
    %p155 = scmp.eq.s32.totalorder %s13, 1
    %p156 = por %p154, %p155
    %p157 = scmp.ne.s32.totalorder %s149, %s152
    %p158 = scmp.eq.s32.totalorder %s13, 0
    %p159 = por %p157, %p158
    %p160 = scmp.ne.s32.totalorder %s149, %s152
    %p161 = scmp.eq.s32.totalorder %s18, 1
    %p162 = por %p160, %p161
    %p163 = scmp.ne.s32.totalorder %s152, %s153
    %p164 = scmp.eq.s32.totalorder %s18, 0
    %p165 = por %p163, %p164
    %p166 = scmp.ne.s32.totalorder %s152, %s153
    %p167 = scmp.eq.s32.totalorder %s19, 1
    %p168 = por %p166, %p167
    %p170 = scmp.ne.s32.totalorder %s153, %s169
    %p171 = scmp.eq.s32.totalorder %s19, 0
    %p172 = por %p170, %p171
    %p173 = scmp.le.s32.totalorder 1, %s13
    %p174 = scmp.lt.s32.totalorder %s13, 3
    %p175 = pnand %p173, %p174
    %p176 = pneg %p175
    // Predicated region
    $region9: #{finetuned_wav2vec2_forward.1} parent=5 // pred_check
      _
    $region10: #{finetuned_wav2vec2_forward.1} parent=5 // pred_check_branch
      %178 = sbr.rel (%p175) target = $region12
    $region11: #{finetuned_wav2vec2_forward.1} parent=5 // pred_region
      %s179 = ssub.s32 %s13, 1
      // Predicated region
      $region13: #{finetuned_wav2vec2_forward.1} parent=11 // pred_check
        %p180 = pneg %p74
      $region14: #{finetuned_wav2vec2_forward.1} parent=11 // pred_check_branch
        %182 = sbr.rel (%p180) target = $region16
      $region15: #{finetuned_wav2vec2_forward.1} parent=11 // pred_region
        _
      $region16: #{finetuned_wav2vec2_forward.1} parent=11 // pred_fallthru
        _
      // Predicated region
      $region17: #{finetuned_wav2vec2_forward.1} parent=11 // pred_check
        %p183 = pneg %p95
      $region18: #{finetuned_wav2vec2_forward.1} parent=11 // pred_check_branch
        %185 = sbr.rel (%p183) target = $region20
      $region19: #{finetuned_wav2vec2_forward.1} parent=11 // pred_region
        _
      $region20: #{finetuned_wav2vec2_forward.1} parent=11 // pred_fallthru
        _
      // Predicated region
      $region21: #{finetuned_wav2vec2_forward.1} parent=11 // pred_check
        %p186 = pneg %p116
      $region22: #{finetuned_wav2vec2_forward.1} parent=11 // pred_check_branch
        %188 = sbr.rel (%p186) target = $region24
      $region23: #{finetuned_wav2vec2_forward.1} parent=11 // pred_region
        _
      $region24: #{finetuned_wav2vec2_forward.1} parent=11 // pred_fallthru
        _
      // Predicated region
      $region25: #{finetuned_wav2vec2_forward.1} parent=11 // pred_check
        %p189 = pneg %p137
      $region26: #{finetuned_wav2vec2_forward.1} parent=11 // pred_check_branch
        %191 = sbr.rel (%p189) target = $region28
      $region27: #{finetuned_wav2vec2_forward.1} parent=11 // pred_region
        _
      $region28: #{finetuned_wav2vec2_forward.1} parent=11 // pred_fallthru
        _
    $region12: #{finetuned_wav2vec2_forward.1} parent=5 // pred_fallthru
      _
    %p192 = scmp.lt.s32.totalorder %s13, 2
    // Predicated region
    $region29: #{finetuned_wav2vec2_forward.1} parent=5 // pred_check
      %p193 = pneg %p192
    $region30: #{finetuned_wav2vec2_forward.1} parent=5 // pred_check_branch
      %195 = sbr.rel (%p193) target = $region32
    $region31: #{finetuned_wav2vec2_forward.1} parent=5 // pred_region
      // Predicated region
      $region33: #{finetuned_wav2vec2_forward.1} parent=31 // pred_check
        %p196 = pneg %p47
      $region34: #{finetuned_wav2vec2_forward.1} parent=31 // pred_check_branch
        %198 = sbr.rel (%p196) target = $region36
      $region35: #{finetuned_wav2vec2_forward.1} parent=31 // pred_region
        %p199 = scmp.lt.s32.totalorder %s20, 1
        %s200 = scalar_select %p199, %s20, 1
        %p201 = scmp.lt.s32.totalorder %s21, 0
        %s202 = scalar_select %p201, %s21, 0
        %s203 = sadd.s32 %s202, %s200
        %s204 = smul.addr %s203, 4
        %s205 = scalar_lea.vmem %s0, %s204
      $region36: #{finetuned_wav2vec2_forward.1} parent=31 // pred_fallthru
        _
    $region32: #{finetuned_wav2vec2_forward.1} parent=5 // pred_fallthru
      _
    %p206 = scmp.le.s32.totalorder 1, %s13
    %p207 = scmp.lt.s32.totalorder %s13, 3
    %p208 = pnand %p206, %p207
    %p209 = pneg %p208
    // Predicated region
    $region37: #{finetuned_wav2vec2_forward.1} parent=5 // pred_check
      _
    $region38: #{finetuned_wav2vec2_forward.1} parent=5 // pred_check_branch
      %211 = sbr.rel (%p208) target = $region40
    $region39: #{finetuned_wav2vec2_forward.1} parent=5 // pred_region
      %s212 = ssub.s32 %s13, 1
      %p213 = scmp.lt.s32.totalorder %s22, 1
      %s214 = scalar_select %p213, %s22, 1
      %p215 = scmp.lt.s32.totalorder %s23, 0
      %s216 = scalar_select %p215, %s23, 0
      %s217 = sadd.s32 %s216, %s214
      %s218 = smul.addr %s217, 4
      %s219 = scalar_lea.vmem %s0, %s218
      %p220 = pneg %p53
      %p221 = pneg %p50
      %p222 = pneg %p74
      %p223 = pneg %p71
      %p224 = pneg %p95
      %p225 = pneg %p92
      %p226 = pneg %p116
      %p227 = pneg %p113
      %p228 = pneg %p137
      %p229 = pneg %p134
      %p230 = pneg %p165
      %p231 = pneg %p162
      %p232 = scmp.lt.s32.totalorder %s22, 1
      %s233 = scalar_select %p232, %s22, 1
      %p234 = scmp.lt.s32.totalorder %s23, 0
      %s235 = scalar_select %p234, %s23, 0
      %s236 = sadd.s32 %s235, %s233
      %s237 = scalar_lea.vmem %s5, %s236
      %p238 = scmp.lt.s32.totalorder %s22, 1
      %s239 = scalar_select %p238, %s22, 1
      %p240 = scmp.lt.s32.totalorder %s23, 0
      %s241 = scalar_select %p240, %s23, 0
      %s242 = sadd.s32 %s241, %s239
      %s243 = smul.addr %s242, 4
      %s244 = scalar_lea.vmem %s0, %s243
      %p245 = scmp.lt.s32.totalorder %s22, 1
      %s246 = scalar_select %p245, %s22, 1
      %p247 = scmp.lt.s32.totalorder %s23, 0
      %s248 = scalar_select %p247, %s23, 0
      %s249 = sadd.s32 %s248, %s246
      %s250 = scalar_lea.vmem %s5, %s249
      %v251 = vld [vmem:[%s244] sm:$0xf]
      %v252 = vld [vmem:[%s1] sm:$0xff]
      %v253 = vld [vmem:[%s1 + $0x8] sm:$0xff]
      %v254 = vld [vmem:[%s1 + $0x10] sm:$0xff]
      %v255 = vld [vmem:[%s1 + $0x18] sm:$0xff]
      %v256 = vld [vmem:[%s2] sm:$0xff]
      %v257 = vld [vmem:[%s2 + $0x8] sm:$0xff]
      %v258 = vld [vmem:[%s2 + $0x10] sm:$0xff]
      %v259 = vld [vmem:[%s2 + $0x18] sm:$0xff]
      %261 = vset.pattern.permute.xlu0 0
      %262 = vperm.xlu0 %261, %v252
      %v263 = vpop.permute.xlu0 %262
      %266 = vset.pattern.permute.xlu0 0
      %267 = vperm.xlu0 %266, %v253
      %v268 = vpop.permute.xlu0 %267
      %271 = vset.pattern.permute.xlu0 0
      %272 = vperm.xlu0 %271, %v254
      %v273 = vpop.permute.xlu0 %272
      %276 = vset.pattern.permute.xlu0 0
      %277 = vperm.xlu0 %276, %v255
      %v278 = vpop.permute.xlu0 %277
      %v280 = vperm.slane %v251, 0
      %v281 = vmul.f32 %v263, %v280
      %v282 = vmul.f32 %v268, %v280
      %v283 = vmul.f32 %v273, %v280
      %v284 = vmul.f32 %v278, %v280
      %286 = vset.pattern.permute.xlu0 0
      %287 = vperm.xlu0 %286, %v256
      %v288 = vpop.permute.xlu0 %287
      %291 = vset.pattern.permute.xlu0 0
      %292 = vperm.xlu0 %291, %v257
      %v293 = vpop.permute.xlu0 %292
      %296 = vset.pattern.permute.xlu0 0
      %297 = vperm.xlu0 %296, %v258
      %v298 = vpop.permute.xlu0 %297
      %301 = vset.pattern.permute.xlu0 0
      %302 = vperm.xlu0 %301, %v259
      %v303 = vpop.permute.xlu0 %302
      %v305 = vadd.f32 %v288, %v281
      %v306 = vadd.f32 %v293, %v282
      %v307 = vadd.f32 %v298, %v283
      %v308 = vadd.f32 %v303, %v284
      %309 = vset.pattern.permute.xlu0 1
      %310 = vperm.xlu0 %309, %v252
      %v311 = vpop.permute.xlu0 %310
      %313 = vset.pattern.permute.xlu0 1
      %314 = vperm.xlu0 %313, %v253
      %v315 = vpop.permute.xlu0 %314
      %317 = vset.pattern.permute.xlu0 1
      %318 = vperm.xlu0 %317, %v254
      %v319 = vpop.permute.xlu0 %318
      %321 = vset.pattern.permute.xlu0 1
      %322 = vperm.xlu0 %321, %v255
      %v323 = vpop.permute.xlu0 %322
      %v325 = vperm.slane %v251, 1
      %v326 = vmul.f32 %v311, %v325
      %v327 = vmul.f32 %v315, %v325
      %v328 = vmul.f32 %v319, %v325
      %v329 = vmul.f32 %v323, %v325
      %v330 = vadd.f32 %v305, %v326
      %v331 = vadd.f32 %v306, %v327
      %v332 = vadd.f32 %v307, %v328
      %v333 = vadd.f32 %v308, %v329
      %334 = vset.pattern.permute.xlu0 2
      %335 = vperm.xlu0 %334, %v252
      %v336 = vpop.permute.xlu0 %335
      %338 = vset.pattern.permute.xlu0 2
      %339 = vperm.xlu0 %338, %v253
      %v340 = vpop.permute.xlu0 %339
      %342 = vset.pattern.permute.xlu0 2
      %343 = vperm.xlu0 %342, %v254
      %v344 = vpop.permute.xlu0 %343
      %346 = vset.pattern.permute.xlu0 2
      %347 = vperm.xlu0 %346, %v255
      %v348 = vpop.permute.xlu0 %347
      %v350 = vperm.slane %v251, 2
      %v351 = vmul.f32 %v336, %v350
      %v352 = vmul.f32 %v340, %v350
      %v353 = vmul.f32 %v344, %v350
      %v354 = vmul.f32 %v348, %v350
      %v355 = vadd.f32 %v330, %v351
      %v356 = vadd.f32 %v331, %v352
      %v357 = vadd.f32 %v332, %v353
      %v358 = vadd.f32 %v333, %v354
      %359 = vset.pattern.permute.xlu0 3
      %360 = vperm.xlu0 %359, %v252
      %v361 = vpop.permute.xlu0 %360
      %363 = vset.pattern.permute.xlu0 3
      %364 = vperm.xlu0 %363, %v253
      %v365 = vpop.permute.xlu0 %364
      %367 = vset.pattern.permute.xlu0 3
      %368 = vperm.xlu0 %367, %v254
      %v369 = vpop.permute.xlu0 %368
      %371 = vset.pattern.permute.xlu0 3
      %372 = vperm.xlu0 %371, %v255
      %v373 = vpop.permute.xlu0 %372
      %v375 = vperm.slane %v251, 3
      %v376 = vmul.f32 %v361, %v375
      %v377 = vmul.f32 %v365, %v375
      %v378 = vmul.f32 %v369, %v375
      %v379 = vmul.f32 %v373, %v375
      %v380 = vadd.f32 %v355, %v376
      %v381 = vadd.f32 %v356, %v377
      %v382 = vadd.f32 %v357, %v378
      %v383 = vadd.f32 %v358, %v379
      %v384 = vmul.f32 %v380, %v380
      %v385 = vmul.f32 %v381, %v381
      %v386 = vmul.f32 %v382, %v382
      %v387 = vmul.f32 %v383, %v383
      %v388 = vmul.f32 %v380, %v384
      %v389 = vmul.f32 %v381, %v385
      %v390 = vmul.f32 %v382, %v386
      %v391 = vmul.f32 %v383, %v387
      %v392 = vmul.f32 %v388, 0.044715
      %v393 = vmul.f32 %v389, 0.044715
      %v394 = vmul.f32 %v390, 0.044715
      %v395 = vmul.f32 %v391, 0.044715
      %v396 = vadd.f32 %v380, %v392
      %v397 = vadd.f32 %v381, %v393
      %v398 = vadd.f32 %v382, %v394
      %v399 = vadd.f32 %v383, %v395
      %v400 = vmul.f32 %v396, 0.7978846
      %v401 = vmul.f32 %v397, 0.7978846
      %v402 = vmul.f32 %v398, 0.7978846
      %v403 = vmul.f32 %v399, 0.7978846
      %v404 = vtanh.pop %v400
      %v405 = vtanh.pop %v401
      %v406 = vtanh.pop %v402
      %v407 = vtanh.pop %v403
      %v408 = vadd.f32 %v404, 1.0
      %v409 = vadd.f32 %v405, 1.0
      %v410 = vadd.f32 %v406, 1.0
      %v411 = vadd.f32 %v407, 1.0
      %v412 = vmul.f32 %v408, 0.5
      %v413 = vmul.f32 %v409, 0.5
      %v414 = vmul.f32 %v410, 0.5
      %v415 = vmul.f32 %v411, 0.5
      %v416 = vmul.f32 %v380, %v412
      %v417 = vmul.f32 %v381, %v413
      %v418 = vmul.f32 %v382, %v414
      %v419 = vmul.f32 %v383, %v415
      %v420 = vld [vmem:[%s3] sm:$0xff]
      %v421 = vld [vmem:[%s3 + $0x8] sm:$0xff]
      %v422 = vld [vmem:[%s3 + $0x10] sm:$0xff]
      %v423 = vld [vmem:[%s3 + $0x18] sm:$0xff]
      %425 = vset.pattern.permute.xlu0 0
      %426 = vperm.xlu0 %425, %v420
      %v427 = vpop.permute.xlu0 %426
      %430 = vset.pattern.permute.xlu0 0
      %431 = vperm.xlu0 %430, %v421
      %v432 = vpop.permute.xlu0 %431
      %435 = vset.pattern.permute.xlu0 0
      %436 = vperm.xlu0 %435, %v422
      %v437 = vpop.permute.xlu0 %436
      %440 = vset.pattern.permute.xlu0 0
      %441 = vperm.xlu0 %440, %v423
      %v442 = vpop.permute.xlu0 %441
      %v444 = vmul.f32 %v427, %v416
      %v445 = vmul.f32 %v432, %v417
      %v446 = vmul.f32 %v437, %v418
      %v447 = vmul.f32 %v442, %v419
      %v448 = vadd.f32 %v444, %v445
      %v449 = vadd.f32 %v448, %v446
      %v450 = vadd.f32 %v449, %v447
      %v451 = vrot.slane %v450, 4
      %v452 = vadd.f32 %v450, %v451
      %v453 = vrot.slane %v452, 2
      %v454 = vadd.f32 %v452, %v453
      %v455 = vrot.slane %v454, 1
      %v456 = vadd.f32 %v454, %v455
      %v457 = vld [vmem:[#allocation2] sm:$0x1]
      %459 = vset.pattern.permute.xlu0 0
      %460 = vperm.xlu0 %459, %v457
      %v461 = vpop.permute.xlu0 %460
      %v463 = vperm.slane %v461, 0
      %v464 = vadd.f32 %v456, %v463
      %465 = vst [vmem:[%s250] sm:$0x1] %v464
      %p466 = scmp.lt.s32.totalorder %s22, 1
      %s467 = scalar_select %p466, %s22, 1
      %p468 = scmp.lt.s32.totalorder %s23, 0
      %s469 = scalar_select %p468, %s23, 0
      %s470 = sadd.s32 %s469, %s467
      %s471 = scalar_lea.vmem %s5, %s470
      // Predicated region
      $region41: #{finetuned_wav2vec2_forward.1} parent=39 // pred_check
        %p472 = pneg %p162
      $region42: #{finetuned_wav2vec2_forward.1} parent=39 // pred_check_branch
        %474 = sbr.rel (%p472) target = $region44
      $region43: #{finetuned_wav2vec2_forward.1} parent=39 // pred_region
        _
      $region44: #{finetuned_wav2vec2_forward.1} parent=39 // pred_fallthru
        _
    $region40: #{finetuned_wav2vec2_forward.1} parent=5 // pred_fallthru
      _
    %p475 = scmp.le.s32.totalorder 2, %s13
    // Predicated region
    $region45: #{finetuned_wav2vec2_forward.1} parent=5 // pred_check
      %p476 = pneg %p475
    $region46: #{finetuned_wav2vec2_forward.1} parent=5 // pred_check_branch
      %478 = sbr.rel (%p476) target = $region48
    $region47: #{finetuned_wav2vec2_forward.1} parent=5 // pred_region
      %s479 = ssub.s32 %s13, 2
      // Predicated region
      $region49: #{finetuned_wav2vec2_forward.1} parent=47 // pred_check
        %p480 = pneg %p168
      $region50: #{finetuned_wav2vec2_forward.1} parent=47 // pred_check_branch
        %482 = sbr.rel (%p480) target = $region52
      $region51: #{finetuned_wav2vec2_forward.1} parent=47 // pred_region
        %p483 = scmp.lt.s32.totalorder %s24, 1
        %s484 = scalar_select %p483, %s24, 1
        %p485 = scmp.lt.s32.totalorder %s25, 0
        %s486 = scalar_select %p485, %s25, 0
        %s487 = sadd.s32 %s486, %s484
        %s488 = scalar_lea.vmem %s5, %s487
      $region52: #{finetuned_wav2vec2_forward.1} parent=47 // pred_fallthru
        _
    $region48: #{finetuned_wav2vec2_forward.1} parent=5 // pred_fallthru
      _
  $region6: #{finetuned_wav2vec2_forward.1} parent=0 // loop_footer
    %s17 = sadd.s32 1, %s13
  $region7: #{finetuned_wav2vec2_forward.1} parent=0 // loop_footer_branch
    %12 = sbr.rel target = $region3
  $region8: #{finetuned_wav2vec2_forward.1} parent=0 // loop_exit
    _

</llo_original>
